<compile_context>
chip_gen: v5e
topology: v5e:2x2
jax: 0.10.0
libtpu: 0.0.40
codegen_flags: <defaults>
</compile_context>

<pallas_src>
import functools

import jax
import jax.numpy as jnp
from jax.experimental import pallas as pl
from jax.experimental.pallas import tpu as pltpu

# ------------------------- model hyper-parameters -------------------------
B = 2            # batch
MAX_LEN = 4      # sum of the max_len_* args
AA_DIM = 16      # aa_dim
D_IN = MAX_LEN * AA_DIM          # input_dim = 64
D_HALF = D_IN // 2               # 32
HIDDEN = 32                      # hidden_dim
LATENT = 16                      # latent_dim
PEP_LEN = 2
PEP_AA = 8
PEP_DIM = PEP_LEN * PEP_AA       # flattened peptide dim = 16
N_HIDDEN_CLF = 32                # classifier hidden width

# packed output slab layout (lane offsets)
OUT_LANES = 128
_XHAT_OFF = 0
_MU_OFF = D_IN                       # 64
_LOGVAR_OFF = D_IN + LATENT          # 80
_XOUT_OFF = D_IN + 2 * LATENT        # 96
_OUT_PAD = OUT_LANES - (_XOUT_OFF + 1)   # 31

# weight slab layout: every matrix at lane offset 0, sublane offset mult. of 16
W_LANES = 128
_EW1_R = 0      # (D_IN, D_HALF)
_EW2_R = 64     # (D_HALF, HIDDEN)
_MLV_R = 96     # fused [muw | lvw]            (HIDDEN, 2*LATENT)
_DZ_R = 128     # fused [dw1 | cw1_z]          (LATENT, HIDDEN + N_HIDDEN_CLF)
_DW2_R = 144    # (HIDDEN, HIDDEN)
_DSW1_R = 176   # (HIDDEN, D_HALF)
_DSW2_R = 208   # (D_HALF, D_IN)
_CPW_R = 240    # cw1_pep                      (PEP_DIM, N_HIDDEN_CLF)
_CW2_R = 256    # cw2 as a row vector          (1, N_HIDDEN_CLF)
_W_ROWS = 272   # multiple of 16 (bf16-tile friendly)

# bias slab: one bias per sublane row, lanes [0, width)
_B_ROWS = 16
_EB1, _EB2, _MLVB, _DB1, _DB2, _DSB1, _DSB2, _CB1, _CB2 = range(9)

_SELU_ALPHA = 1.6732632423543772
_SELU_SCALE = 1.0507009873554805


def _selu(x):
    # exp() of the discarded positive branch cannot produce NaN in f32,
    # so the jnp.minimum clamp is dropped (pure VALU filler removal).
    return _SELU_SCALE * jnp.where(x > 0, x, _SELU_ALPHA * (jnp.exp(x) - 1.0))


# ------------------------------ the kernel --------------------------------
def _two_stage_kernel(x_ref, pep_ref, w_ref, b_ref, out_ref, *, cd):
    """cd = MXU operand dtype (bf16 fast path on v6e/v7x, f32 debug path)."""
    x = x_ref[...]
    pep = pep_ref[...]

    def mm(a, r0, k, n):
        return jnp.dot(a, w_ref[r0:r0 + k, 0:n],
                       preferred_element_type=jnp.float32)

    def bias(i, n):
        return b_ref[i:i + 1, 0:n]          # f32 (1, n), broadcasts over rows

    # ---- encoder: Linear -> SELU -> Linear -> SELU (f32 accumulate/activate)
    h = _selu(mm(x, _EW1_R, D_IN, D_HALF) + bias(_EB1, D_HALF))
    h = _selu(mm(h.astype(cd), _EW2_R, D_HALF, HIDDEN) + bias(_EB2, HIDDEN))

    # ---- fused mu/logvar head: one (HIDDEN, 2*LATENT) matmul
    mlv = mm(h.astype(cd), _MLV_R, HIDDEN, 2 * LATENT) + bias(_MLVB, 2 * LATENT)
    z = mlv[:, :LATENT].astype(cd)           # eval-mode reparameterise: z = mu

    # ---- fused (decoder layer 1 | classifier z-projection): one z @ (16,64)
    dz = mm(z, _DZ_R, LATENT, HIDDEN + N_HIDDEN_CLF)
    d = _selu(dz[:, :HIDDEN] + bias(_DB1, HIDDEN))
    d = _selu(mm(d.astype(cd), _DW2_R, HIDDEN, HIDDEN) + bias(_DB2, HIDDEN))

    # ---- decoder_sequence: Linear -> SELU -> Linear
    s = _selu(mm(d.astype(cd), _DSW1_R, HIDDEN, D_HALF) + bias(_DSB1, D_HALF))
    x_hat = mm(s.astype(cd), _DSW2_R, D_HALF, D_IN) + bias(_DSB2, D_IN)

    # ---- classifier: relu(z@cw1_z + pep@cw1_pep + cb1); no XLU concat
    c = jnp.maximum(dz[:, HIDDEN:HIDDEN + N_HIDDEN_CLF]
                    + mm(pep, _CPW_R, PEP_DIM, N_HIDDEN_CLF)
                    + bias(_CB1, N_HIDDEN_CLF), 0.0)
    # N=1 out_layer stays on the VPU: multiply + lane reduction.
    cw2r = w_ref[_CW2_R:_CW2_R + 1, 0:N_HIDDEN_CLF].astype(jnp.float32)
    x_out = jnp.sum(c * cw2r, axis=-1, keepdims=True) + bias(_CB2, 1)

    # ---- single lane-dense (TB,128) store: [x_hat | mu | logvar | x_out | 0]
    pad = jnp.zeros((x.shape[0], _OUT_PAD), jnp.float32)
    out_ref[...] = jnp.concatenate([x_hat, mlv, x_out, pad], axis=-1)


# --------------------------- parameter handling ----------------------------
def init_params(key):
    """Deterministic init; shapes match the PyTorch module, stored as (in, out)."""
    def lin(k, fan_in, fan_out):
        kw, kb = jax.random.split(k)
        bound = 1.0 / jnp.sqrt(fan_in)
        w = jax.random.uniform(kw, (fan_in, fan_out), jnp.float32, -bound, bound)
        b = jax.random.uniform(kb, (1, fan_out), jnp.float32, -bound, bound)
        return w, b

    ks = jax.random.split(key, 10)
    p = {}
    p["ew1"], p["eb1"] = lin(ks[0], D_IN, D_HALF)
    p["ew2"], p["eb2"] = lin(ks[1], D_HALF, HIDDEN)
    p["muw"], p["mub"] = lin(ks[2], HIDDEN, LATENT)
    p["lvw"], p["lvb"] = lin(ks[3], HIDDEN, LATENT)
    p["dw1"], p["db1"] = lin(ks[4], LATENT, HIDDEN)
    p["dw2"], p["db2"] = lin(ks[5], HIDDEN, HIDDEN)
    p["dsw1"], p["dsb1"] = lin(ks[6], HIDDEN, D_HALF)
    p["dsw2"], p["dsb2"] = lin(ks[7], D_HALF, D_IN)
    p["cw1"], p["cb1"] = lin(ks[8], LATENT + PEP_DIM, N_HIDDEN_CLF)
    p["cw2"], p["cb2"] = lin(ks[9], N_HIDDEN_CLF, 1)
    return p


def _pack_weights(p, dtype):
    """All weight matrices in one (272,128) slab (sublane-aligned, lane off. 0)."""
    def blk(w, rows):
        r, c = w.shape
        return jnp.pad(w, ((0, rows - r), (0, W_LANES - c)))

    slab = jnp.concatenate([
        blk(p["ew1"], 64),                                                # row 0
        blk(p["ew2"], 32),                                                # 64
        blk(jnp.concatenate([p["muw"], p["lvw"]], axis=1), 32),           # 96
        blk(jnp.concatenate([p["dw1"], p["cw1"][:LATENT, :]], axis=1), 16),  # 128
        blk(p["dw2"], 32),                                                # 144
        blk(p["dsw1"], 32),                                               # 176
        blk(p["dsw2"], 32),                                               # 208
        blk(p["cw1"][LATENT:, :], 16),                                    # 240
        blk(p["cw2"].reshape(1, N_HIDDEN_CLF), 16),                       # 256
    ], axis=0)
    return slab.astype(dtype)


def _pack_biases(p):
    """All 9 biases in one (16,128) f32 slab, one bias per sublane row."""
    rows = [p["eb1"], p["eb2"],
            jnp.concatenate([p["mub"], p["lvb"]], axis=1),
            p["db1"], p["db2"], p["dsb1"], p["dsb2"], p["cb1"], p["cb2"]]
    slab = jnp.zeros((_B_ROWS, OUT_LANES), jnp.float32)
    for i, r in enumerate(rows):
        slab = slab.at[i, :r.shape[1]].set(r[0].astype(jnp.float32))
    return slab


# ------------------------------ batch tiling -------------------------------
def _round_up(n, m):
    return ((n + m - 1) // m) * m


def _pick_batch_tile(b):
    """Single tile for small batches; >=2 tiles (capped at 2048 rows) for large
    batches so v7x megacore shards the 'parallel' grid axis; ceil-division sizing
    minimises padding; rounded to 16 rows so bf16 row tiles stay tile-aligned."""
    b16 = _round_up(max(b, 1), 16)
    if b16 <= 256:
        return b16, 1
    cap = 2048
    n_tiles = max(2, pl.cdiv(b16, cap))
    tb = _round_up(pl.cdiv(b16, n_tiles), 16)
    return tb, pl.cdiv(b16, tb)


# ------------------------------- the wrapper -------------------------------
@functools.partial(jax.jit, static_argnames=("matmul_dtype",))
def two_stage_vae_clf_forward(x_tcr, x_pep, params, matmul_dtype=jnp.float32):
    """x_tcr: (B, MAX_LEN, AA_DIM); x_pep: (B, PEP_LEN, PEP_AA)."""
    b = x_tcr.shape[0]
    x_flat = x_tcr.reshape(b, -1).astype(matmul_dtype)
    pep_flat = x_pep.reshape(b, -1).astype(matmul_dtype)

    tb, n_tiles = _pick_batch_tile(b)
    b_pad = tb * n_tiles
    if b_pad != b:
        x_flat = jnp.pad(x_flat, ((0, b_pad - b), (0, 0)))
        pep_flat = jnp.pad(pep_flat, ((0, b_pad - b), (0, 0)))

    w_slab = _pack_weights(params, matmul_dtype)
    b_slab = _pack_biases(params)

    in_specs = [
        pl.BlockSpec((tb, D_IN), lambda i: (i, 0)),           # x rows
        pl.BlockSpec((tb, PEP_DIM), lambda i: (i, 0)),        # pep rows
        pl.BlockSpec((_W_ROWS, W_LANES), lambda i: (0, 0)),   # resident weights
        pl.BlockSpec((_B_ROWS, OUT_LANES), lambda i: (0, 0)),  # resident biases
    ]
    out_spec = pl.BlockSpec((tb, OUT_LANES), lambda i: (i, 0))

    itemsize = jnp.dtype(matmul_dtype).itemsize
    flops_per_row = 2 * (D_IN * D_HALF + D_HALF * HIDDEN + HIDDEN * 2 * LATENT
                         + LATENT * (HIDDEN + N_HIDDEN_CLF) + HIDDEN * HIDDEN
                         + HIDDEN * D_HALF + D_HALF * D_IN
                         + PEP_DIM * N_HIDDEN_CLF + N_HIDDEN_CLF)
    cost = pl.CostEstimate(
        flops=flops_per_row * b_pad,
        transcendentals=(2 * D_HALF + 3 * HIDDEN) * b_pad,     # SELU exps
        bytes_accessed=(b_pad * (D_IN + PEP_DIM) * itemsize
                        + b_pad * OUT_LANES * 4
                        + _W_ROWS * W_LANES * itemsize
                        + _B_ROWS * OUT_LANES * 4),
    )

    packed = pl.pallas_call(
        functools.partial(_two_stage_kernel, cd=matmul_dtype),
        out_shape=jax.ShapeDtypeStruct((b_pad, OUT_LANES), jnp.float32),
        grid_spec=pltpu.PrefetchScalarGridSpec(
            num_scalar_prefetch=0,
            grid=(n_tiles,),
            in_specs=in_specs,
            out_specs=out_spec,
        ),
        compiler_params=pltpu.CompilerParams(
            dimension_semantics=("parallel",)),
        cost_estimate=cost,
    )(x_flat, pep_flat, w_slab, b_slab)

    x_hat = packed[:b, _XHAT_OFF:_XHAT_OFF + D_IN]
    mu = packed[:b, _MU_OFF:_MU_OFF + LATENT]
    logvar = packed[:b, _LOGVAR_OFF:_LOGVAR_OFF + LATENT]
    x_out = packed[:b, _XOUT_OFF:_XOUT_OFF + 1]
    return x_hat, mu, logvar, x_out


# ----------------------------- plain-JAX check -----------------------------
def _reference_forward(x_tcr, x_pep, p):
    """Plain-JAX reference of the PyTorch forward (eval semantics)."""
    x = x_tcr.reshape(x_tcr.shape[0], -1)
    pep = x_pep.reshape(x_pep.shape[0], -1)
    h = _selu(x @ p["ew1"] + p["eb1"])
    h = _selu(h @ p["ew2"] + p["eb2"])
    mu = h @ p["muw"] + p["mub"]
    logvar = h @ p["lvw"] + p["lvb"]
    z = mu
    d = _selu(z @ p["dw1"] + p["db1"])
    d = _selu(d @ p["dw2"] + p["db2"])
    s = _selu(d @ p["dsw1"] + p["dsb1"])
    x_hat = s @ p["dsw2"] + p["dsb2"]
    c = jnp.maximum(jnp.concatenate([z, pep], axis=1) @ p["cw1"] + p["cb1"], 0.0)
    x_out = c @ p["cw2"] + p["cb2"]
    return x_hat, mu, logvar, x_out


if __name__ == "__main__":
    key = jax.random.PRNGKey(0)
    k_x, k_p, k_w = jax.random.split(key, 3)

    x_tcr = jax.random.normal(k_x, (B, MAX_LEN, AA_DIM), jnp.float32)
    x_pep = jax.random.normal(k_p, (B, PEP_LEN, PEP_AA), jnp.float32)
    params = init_params(k_w)

    refs = _reference_forward(x_tcr, x_pep, params)

    # f32 path: strict check against the plain-JAX reference.
    outs = jax.block_until_ready(
        two_stage_vae_clf_forward(x_tcr, x_pep, params, matmul_dtype=jnp.float32))
    for o, r in zip(outs, refs):
        assert o.shape == r.shape
        assert jnp.allclose(o, r, atol=1e-4, rtol=1e-4), float(jnp.max(jnp.abs(o - r)))

    # bf16 MXU fast path (v6e/v7x): same kernel, looser tolerance (operand rounding).
    outs_bf16 = jax.block_until_ready(
        two_stage_vae_clf_forward(x_tcr, x_pep, params, matmul_dtype=jnp.bfloat16))
    for o, r in zip(outs_bf16, refs):
        assert o.shape == r.shape
        assert jnp.allclose(o, r, atol=1e-1, rtol=1e-1), float(jnp.max(jnp.abs(o - r)))

    print("KERNEL_OK")
</pallas_src>

<mosaic_0001>
module attributes {stable_mosaic.version = 11 : i64} {
  func.func @_two_stage_kernel(%arg0: i32, %arg1: memref<16x64xf32, #tpu.memory_space<vmem>>, %arg2: memref<16x16xf32, #tpu.memory_space<vmem>>, %arg3: memref<272x128xf32, #tpu.memory_space<vmem>>, %arg4: memref<16x128xf32, #tpu.memory_space<vmem>>, %arg5: memref<16x128xf32, #tpu.memory_space<vmem>>) attributes {dimension_semantics = [#tpu.dimension_semantics<parallel>], iteration_bounds = array<i64: 1>, scalar_prefetch = 0 : i64, scratch_operands = 0 : i64, tpu.core_type = #tpu.core_type<tc>, window_params = [{transform_indices = @transform_0, window_bounds = array<i64: 16, 64>}, {transform_indices = @transform_1, window_bounds = array<i64: 16, 16>}, {pipeline_mode = #tpu.pipeline_mode<synchronous>, transform_indices = @transform_2, window_bounds = array<i64: 272, 128>}, {pipeline_mode = #tpu.pipeline_mode<synchronous>, transform_indices = @transform_3, window_bounds = array<i64: 16, 128>}, {transform_indices = @transform_4, window_bounds = array<i64: 16, 128>}]} {
    %c0 = arith.constant 0 : index
    %c0_0 = arith.constant 0 : index
    %0 = vector.load %arg1[%c0, %c0_0] : memref<16x64xf32, #tpu.memory_space<vmem>>, vector<16x64xf32>
    %c0_1 = arith.constant 0 : index
    %c0_2 = arith.constant 0 : index
    %1 = vector.load %arg2[%c0_1, %c0_2] : memref<16x16xf32, #tpu.memory_space<vmem>>, vector<16x16xf32>
    %c0_3 = arith.constant 0 : index
    %c0_4 = arith.constant 0 : index
    %2 = vector.load %arg3[%c0_3, %c0_4] : memref<272x128xf32, #tpu.memory_space<vmem>>, vector<64x32xf32>
    %cst = arith.constant dense<0.000000e+00> : vector<16x32xf32>
    %3 = tpu.matmul %0, %2, %cst {dimension_numbers = #tpu.dot_dimension_numbers<[1], [0], [0], [1], [0, 0, 1, 1], [], []>} : vector<16x64xf32>, vector<64x32xf32>, vector<16x32xf32> -> vector<16x32xf32>
    %c0_5 = arith.constant 0 : index
    %c0_6 = arith.constant 0 : index
    %4 = vector.load %arg4[%c0_5, %c0_6] : memref<16x128xf32, #tpu.memory_space<vmem>>, vector<1x32xf32>
    %5 = vector.broadcast %4 : vector<1x32xf32> to vector<16x32xf32>
    %6 = arith.addf %3, %5 : vector<16x32xf32>
    %cst_7 = arith.constant 0.000000e+00 : f32
    %7 = vector.broadcast %cst_7 : f32 to vector<16x32xf32>
    %8 = arith.cmpf ogt, %6, %7 : vector<16x32xf32>
    %9 = math.exp %6 : vector<16x32xf32>
    %cst_8 = arith.constant 1.000000e+00 : f32
    %10 = vector.broadcast %cst_8 : f32 to vector<16x32xf32>
    %11 = arith.subf %9, %10 : vector<16x32xf32>
    %cst_9 = arith.constant 1.67326319 : f32
    %12 = vector.broadcast %cst_9 : f32 to vector<16x32xf32>
    %13 = arith.mulf %12, %11 : vector<16x32xf32>
    %14 = arith.select %8, %6, %13 : vector<16x32xi1>, vector<16x32xf32>
    %cst_10 = arith.constant 1.05070102 : f32
    %15 = vector.broadcast %cst_10 : f32 to vector<16x32xf32>
    %16 = arith.mulf %15, %14 : vector<16x32xf32>
    %c64 = arith.constant 64 : index
    %c0_11 = arith.constant 0 : index
    %17 = vector.load %arg3[%c64, %c0_11] : memref<272x128xf32, #tpu.memory_space<vmem>>, vector<32x32xf32>
    %cst_12 = arith.constant dense<0.000000e+00> : vector<16x32xf32>
    %18 = tpu.matmul %16, %17, %cst_12 {dimension_numbers = #tpu.dot_dimension_numbers<[1], [0], [0], [1], [0, 0, 1, 1], [], []>} : vector<16x32xf32>, vector<32x32xf32>, vector<16x32xf32> -> vector<16x32xf32>
    %c1 = arith.constant 1 : index
    %c0_13 = arith.constant 0 : index
    %19 = vector.load %arg4[%c1, %c0_13] : memref<16x128xf32, #tpu.memory_space<vmem>>, vector<1x32xf32>
    %20 = vector.broadcast %19 : vector<1x32xf32> to vector<16x32xf32>
    %21 = arith.addf %18, %20 : vector<16x32xf32>
    %cst_14 = arith.constant 0.000000e+00 : f32
    %22 = vector.broadcast %cst_14 : f32 to vector<16x32xf32>
    %23 = arith.cmpf ogt, %21, %22 : vector<16x32xf32>
    %24 = math.exp %21 : vector<16x32xf32>
    %cst_15 = arith.constant 1.000000e+00 : f32
    %25 = vector.broadcast %cst_15 : f32 to vector<16x32xf32>
    %26 = arith.subf %24, %25 : vector<16x32xf32>
    %cst_16 = arith.constant 1.67326319 : f32
    %27 = vector.broadcast %cst_16 : f32 to vector<16x32xf32>
    %28 = arith.mulf %27, %26 : vector<16x32xf32>
    %29 = arith.select %23, %21, %28 : vector<16x32xi1>, vector<16x32xf32>
    %cst_17 = arith.constant 1.05070102 : f32
    %30 = vector.broadcast %cst_17 : f32 to vector<16x32xf32>
    %31 = arith.mulf %30, %29 : vector<16x32xf32>
    %c96 = arith.constant 96 : index
    %c0_18 = arith.constant 0 : index
    %32 = vector.load %arg3[%c96, %c0_18] : memref<272x128xf32, #tpu.memory_space<vmem>>, vector<32x32xf32>
    %cst_19 = arith.constant dense<0.000000e+00> : vector<16x32xf32>
    %33 = tpu.matmul %31, %32, %cst_19 {dimension_numbers = #tpu.dot_dimension_numbers<[1], [0], [0], [1], [0, 0, 1, 1], [], []>} : vector<16x32xf32>, vector<32x32xf32>, vector<16x32xf32> -> vector<16x32xf32>
    %c2 = arith.constant 2 : index
    %c0_20 = arith.constant 0 : index
    %34 = vector.load %arg4[%c2, %c0_20] : memref<16x128xf32, #tpu.memory_space<vmem>>, vector<1x32xf32>
    %35 = vector.broadcast %34 : vector<1x32xf32> to vector<16x32xf32>
    %36 = arith.addf %33, %35 : vector<16x32xf32>
    %37 = vector.extract_strided_slice %36 {offsets = [0, 0], sizes = [16, 16], strides = [1, 1]} : vector<16x32xf32> to vector<16x16xf32>
    %c128 = arith.constant 128 : index
    %c0_21 = arith.constant 0 : index
    %38 = vector.load %arg3[%c128, %c0_21] : memref<272x128xf32, #tpu.memory_space<vmem>>, vector<16x64xf32>
    %cst_22 = arith.constant dense<0.000000e+00> : vector<16x64xf32>
    %39 = tpu.matmul %37, %38, %cst_22 {dimension_numbers = #tpu.dot_dimension_numbers<[1], [0], [0], [1], [0, 0, 1, 1], [], []>} : vector<16x16xf32>, vector<16x64xf32>, vector<16x64xf32> -> vector<16x64xf32>
    %40 = vector.extract_strided_slice %39 {offsets = [0, 0], sizes = [16, 32], strides = [1, 1]} : vector<16x64xf32> to vector<16x32xf32>
    %c3 = arith.constant 3 : index
    %c0_23 = arith.constant 0 : index
    %41 = vector.load %arg4[%c3, %c0_23] : memref<16x128xf32, #tpu.memory_space<vmem>>, vector<1x32xf32>
    %42 = vector.broadcast %41 : vector<1x32xf32> to vector<16x32xf32>
    %43 = arith.addf %40, %42 : vector<16x32xf32>
    %cst_24 = arith.constant 0.000000e+00 : f32
    %44 = vector.broadcast %cst_24 : f32 to vector<16x32xf32>
    %45 = arith.cmpf ogt, %43, %44 : vector<16x32xf32>
    %46 = math.exp %43 : vector<16x32xf32>
    %cst_25 = arith.constant 1.000000e+00 : f32
    %47 = vector.broadcast %cst_25 : f32 to vector<16x32xf32>
    %48 = arith.subf %46, %47 : vector<16x32xf32>
    %cst_26 = arith.constant 1.67326319 : f32
    %49 = vector.broadcast %cst_26 : f32 to vector<16x32xf32>
    %50 = arith.mulf %49, %48 : vector<16x32xf32>
    %51 = arith.select %45, %43, %50 : vector<16x32xi1>, vector<16x32xf32>
    %cst_27 = arith.constant 1.05070102 : f32
    %52 = vector.broadcast %cst_27 : f32 to vector<16x32xf32>
    %53 = arith.mulf %52, %51 : vector<16x32xf32>
    %c144 = arith.constant 144 : index
    %c0_28 = arith.constant 0 : index
    %54 = vector.load %arg3[%c144, %c0_28] : memref<272x128xf32, #tpu.memory_space<vmem>>, vector<32x32xf32>
    %cst_29 = arith.constant dense<0.000000e+00> : vector<16x32xf32>
    %55 = tpu.matmul %53, %54, %cst_29 {dimension_numbers = #tpu.dot_dimension_numbers<[1], [0], [0], [1], [0, 0, 1, 1], [], []>} : vector<16x32xf32>, vector<32x32xf32>, vector<16x32xf32> -> vector<16x32xf32>
    %c4 = arith.constant 4 : index
    %c0_30 = arith.constant 0 : index
    %56 = vector.load %arg4[%c4, %c0_30] : memref<16x128xf32, #tpu.memory_space<vmem>>, vector<1x32xf32>
    %57 = vector.broadcast %56 : vector<1x32xf32> to vector<16x32xf32>
    %58 = arith.addf %55, %57 : vector<16x32xf32>
    %cst_31 = arith.constant 0.000000e+00 : f32
    %59 = vector.broadcast %cst_31 : f32 to vector<16x32xf32>
    %60 = arith.cmpf ogt, %58, %59 : vector<16x32xf32>
    %61 = math.exp %58 : vector<16x32xf32>
    %cst_32 = arith.constant 1.000000e+00 : f32
    %62 = vector.broadcast %cst_32 : f32 to vector<16x32xf32>
    %63 = arith.subf %61, %62 : vector<16x32xf32>
    %cst_33 = arith.constant 1.67326319 : f32
    %64 = vector.broadcast %cst_33 : f32 to vector<16x32xf32>
    %65 = arith.mulf %64, %63 : vector<16x32xf32>
    %66 = arith.select %60, %58, %65 : vector<16x32xi1>, vector<16x32xf32>
    %cst_34 = arith.constant 1.05070102 : f32
    %67 = vector.broadcast %cst_34 : f32 to vector<16x32xf32>
    %68 = arith.mulf %67, %66 : vector<16x32xf32>
    %c176 = arith.constant 176 : index
    %c0_35 = arith.constant 0 : index
    %69 = vector.load %arg3[%c176, %c0_35] : memref<272x128xf32, #tpu.memory_space<vmem>>, vector<32x32xf32>
    %cst_36 = arith.constant dense<0.000000e+00> : vector<16x32xf32>
    %70 = tpu.matmul %68, %69, %cst_36 {dimension_numbers = #tpu.dot_dimension_numbers<[1], [0], [0], [1], [0, 0, 1, 1], [], []>} : vector<16x32xf32>, vector<32x32xf32>, vector<16x32xf32> -> vector<16x32xf32>
    %c5 = arith.constant 5 : index
    %c0_37 = arith.constant 0 : index
    %71 = vector.load %arg4[%c5, %c0_37] : memref<16x128xf32, #tpu.memory_space<vmem>>, vector<1x32xf32>
    %72 = vector.broadcast %71 : vector<1x32xf32> to vector<16x32xf32>
    %73 = arith.addf %70, %72 : vector<16x32xf32>
    %cst_38 = arith.constant 0.000000e+00 : f32
    %74 = vector.broadcast %cst_38 : f32 to vector<16x32xf32>
    %75 = arith.cmpf ogt, %73, %74 : vector<16x32xf32>
    %76 = math.exp %73 : vector<16x32xf32>
    %cst_39 = arith.constant 1.000000e+00 : f32
    %77 = vector.broadcast %cst_39 : f32 to vector<16x32xf32>
    %78 = arith.subf %76, %77 : vector<16x32xf32>
    %cst_40 = arith.constant 1.67326319 : f32
    %79 = vector.broadcast %cst_40 : f32 to vector<16x32xf32>
    %80 = arith.mulf %79, %78 : vector<16x32xf32>
    %81 = arith.select %75, %73, %80 : vector<16x32xi1>, vector<16x32xf32>
    %cst_41 = arith.constant 1.05070102 : f32
    %82 = vector.broadcast %cst_41 : f32 to vector<16x32xf32>
    %83 = arith.mulf %82, %81 : vector<16x32xf32>
    %c208 = arith.constant 208 : index
    %c0_42 = arith.constant 0 : index
    %84 = vector.load %arg3[%c208, %c0_42] : memref<272x128xf32, #tpu.memory_space<vmem>>, vector<32x64xf32>
    %cst_43 = arith.constant dense<0.000000e+00> : vector<16x64xf32>
    %85 = tpu.matmul %83, %84, %cst_43 {dimension_numbers = #tpu.dot_dimension_numbers<[1], [0], [0], [1], [0, 0, 1, 1], [], []>} : vector<16x32xf32>, vector<32x64xf32>, vector<16x64xf32> -> vector<16x64xf32>
    %c6 = arith.constant 6 : index
    %c0_44 = arith.constant 0 : index
    %86 = vector.load %arg4[%c6, %c0_44] : memref<16x128xf32, #tpu.memory_space<vmem>>, vector<1x64xf32>
    %87 = vector.broadcast %86 : vector<1x64xf32> to vector<16x64xf32>
    %88 = arith.addf %85, %87 : vector<16x64xf32>
    %89 = vector.extract_strided_slice %39 {offsets = [0, 32], sizes = [16, 32], strides = [1, 1]} : vector<16x64xf32> to vector<16x32xf32>
    %c240 = arith.constant 240 : index
    %c0_45 = arith.constant 0 : index
    %90 = vector.load %arg3[%c240, %c0_45] : memref<272x128xf32, #tpu.memory_space<vmem>>, vector<16x32xf32>
    %cst_46 = arith.constant dense<0.000000e+00> : vector<16x32xf32>
    %91 = tpu.matmul %1, %90, %cst_46 {dimension_numbers = #tpu.dot_dimension_numbers<[1], [0], [0], [1], [0, 0, 1, 1], [], []>} : vector<16x16xf32>, vector<16x32xf32>, vector<16x32xf32> -> vector<16x32xf32>
    %92 = arith.addf %89, %91 : vector<16x32xf32>
    %c7 = arith.constant 7 : index
    %c0_47 = arith.constant 0 : index
    %93 = vector.load %arg4[%c7, %c0_47] : memref<16x128xf32, #tpu.memory_space<vmem>>, vector<1x32xf32>
    %94 = vector.broadcast %93 : vector<1x32xf32> to vector<16x32xf32>
    %95 = arith.addf %92, %94 : vector<16x32xf32>
    %cst_48 = arith.constant 0.000000e+00 : f32
    %96 = vector.broadcast %cst_48 : f32 to vector<16x32xf32>
    %97 = arith.maximumf %95, %96 : vector<16x32xf32>
    %c256 = arith.constant 256 : index
    %c0_49 = arith.constant 0 : index
    %98 = vector.load %arg3[%c256, %c0_49] : memref<272x128xf32, #tpu.memory_space<vmem>>, vector<1x32xf32>
    %99 = vector.broadcast %98 : vector<1x32xf32> to vector<16x32xf32>
    %100 = arith.mulf %97, %99 : vector<16x32xf32>
    %cst_50 = arith.constant dense<0.000000e+00> : vector<16xf32>
    %101 = vector.multi_reduction <add>, %100, %cst_50 [1] : vector<16x32xf32> to vector<16xf32>
    %102 = vector.shape_cast %101 : vector<16xf32> to vector<16x1xf32>
    %c8 = arith.constant 8 : index
    %c0_51 = arith.constant 0 : index
    %103 = vector.load %arg4[%c8, %c0_51] : memref<16x128xf32, #tpu.memory_space<vmem>>, vector<1x1xf32>
    %104 = vector.broadcast %103 : vector<1x1xf32> to vector<16x1xf32>
    %105 = arith.addf %102, %104 : vector<16x1xf32>
    %cst_52 = arith.constant 0.000000e+00 : f32
    %106 = vector.broadcast %cst_52 : f32 to vector<16x31xf32>
    %107 = tpu.concatenate %88, %36, %105, %106 in 1 : vector<16x64xf32>, vector<16x32xf32>, vector<16x1xf32>, vector<16x31xf32> -> vector<16x128xf32>
    %c0_53 = arith.constant 0 : index
    %c0_54 = arith.constant 0 : index
    %108 = vector.load %arg5[%c0_53, %c0_54] : memref<16x128xf32, #tpu.memory_space<vmem>>, vector<16x128xf32>
    tpu.vector_store %arg5[%c0_53, %c0_54], %107 {strides = array<i32>} : memref<16x128xf32, #tpu.memory_space<vmem>>, vector<16x128xf32>,
    return
  }
  func.func @transform_0(%arg0: i32) -> (i32, i32) {
    %c0_i32 = arith.constant 0 : i32
    %c0_i32_0 = arith.constant 0 : i32
    return %arg0, %c0_i32 : i32, i32
  }
  func.func @transform_1(%arg0: i32) -> (i32, i32) {
    %c0_i32 = arith.constant 0 : i32
    %c0_i32_0 = arith.constant 0 : i32
    return %arg0, %c0_i32 : i32, i32
  }
  func.func @transform_2(%arg0: i32) -> (i32, i32) {
    %c0_i32 = arith.constant 0 : i32
    %c0_i32_0 = arith.constant 0 : i32
    %c0_i32_1 = arith.constant 0 : i32
    return %c0_i32, %c0_i32_0 : i32, i32
  }
  func.func @transform_3(%arg0: i32) -> (i32, i32) {
    %c0_i32 = arith.constant 0 : i32
    %c0_i32_0 = arith.constant 0 : i32
    %c0_i32_1 = arith.constant 0 : i32
    return %c0_i32, %c0_i32_0 : i32, i32
  }
  func.func @transform_4(%arg0: i32) -> (i32, i32) {
    %c0_i32 = arith.constant 0 : i32
    %c0_i32_0 = arith.constant 0 : i32
    return %arg0, %c0_i32 : i32, i32
  }
}

</mosaic_0001>

<llo_original>
// kernel: two_stage_vae_clf_forward.1
$region0: #{two_stage_vae_clf_forward.1}
  #allocation0 [shape = 'u32[]', space=smem, size = 0x4, offset = 0x4, fixed_abs, tag = 'smem constant byte address 0x4 - core index']
  #allocation1 [shape = 'u32[72,128]{1,0:T(1,128)}', space=vmem, size = 0x9000, scoped, tag = 'internal scratch']
  %s0 = inlined_call_operand.vmem [shape: f32[16,64], index: 0, kind: input, shape index: {}]
  %s1 = inlined_call_operand.vmem [shape: f32[16,16], index: 1, kind: input, shape index: {}]
  %s2 = inlined_call_operand.vmem [shape: f32[272,128], index: 2, kind: input, shape index: {}]
  %s3 = inlined_call_operand.vmem [shape: f32[16,128], index: 3, kind: input, shape index: {}]
  %s4 = inlined_call_operand.vmem [shape: f32[16,128], index: 4, kind: output, shape index: {}]
  %s5 = sld [smem:[#allocation0]]
  $region26: #{two_stage_vae_clf_forward.1} parent=0
    _
  %s7 = ssub.s32 1, %s5
  %s8 = scalar_select 0, %s7, %s5
  // Predicated region
  $region2: #{two_stage_vae_clf_forward.1} parent=0 // pred_check
    _
  $region3: #{two_stage_vae_clf_forward.1} parent=0 // pred_check_branch
    %10 = sbr.rel (0) target = $region5
  $region4: #{two_stage_vae_clf_forward.1} parent=0 // pred_region
    _
  $region5: #{two_stage_vae_clf_forward.1} parent=0 // pred_fallthru
    _
  // Predicated region
  $region6: #{two_stage_vae_clf_forward.1} parent=0 // pred_check
    _
  $region7: #{two_stage_vae_clf_forward.1} parent=0 // pred_check_branch
    %12 = sbr.rel (0) target = $region9
  $region8: #{two_stage_vae_clf_forward.1} parent=0 // pred_region
    _
  $region9: #{two_stage_vae_clf_forward.1} parent=0 // pred_fallthru
    _
  // Predicated region
  $region10: #{two_stage_vae_clf_forward.1} parent=0 // pred_check
    _
  $region11: #{two_stage_vae_clf_forward.1} parent=0 // pred_check_branch
    %14 = sbr.rel (0) target = $region13
  $region12: #{two_stage_vae_clf_forward.1} parent=0 // pred_region
    _
  $region13: #{two_stage_vae_clf_forward.1} parent=0 // pred_fallthru
    _
  // Predicated region
  $region14: #{two_stage_vae_clf_forward.1} parent=0 // pred_check
    _
  $region15: #{two_stage_vae_clf_forward.1} parent=0 // pred_check_branch
    %16 = sbr.rel (0) target = $region17
  $region16: #{two_stage_vae_clf_forward.1} parent=0 // pred_region
    _
  $region17: #{two_stage_vae_clf_forward.1} parent=0 // pred_fallthru
    _
  %v17 = vld [vmem:[%s0] sm:$0xff]
  %v18 = vld [vmem:[%s0 + $0x8] sm:$0xff]
  %v19 = vld [vmem:[%s1] sm:$0xff]
  %v20 = vld [vmem:[%s1 + $0x8] sm:$0xff]
  %v21 = vld [vmem:[%s2] sm:$0xff]
  %v22 = vld [vmem:[%s2 + $0x8] sm:$0xff]
  %v23 = vld [vmem:[%s2 + $0x10] sm:$0xff]
  %v24 = vld [vmem:[%s2 + $0x18] sm:$0xff]
  %v25 = vld [vmem:[%s2 + $0x20] sm:$0xff]
  %v26 = vld [vmem:[%s2 + $0x28] sm:$0xff]
  %v27 = vld [vmem:[%s2 + $0x30] sm:$0xff]
  %v28 = vld [vmem:[%s2 + $0x38] sm:$0xff]
  %v29 = vld [vmem:[%s3] sm:$0x1]
  %v30 = vperm.slane %v29, 0
  %vm31 = vcmask 523264
  %v33 = vsel %vm31, %v17, 0
  %v36 = vsel %vm31, %v18, 0
  %38 = vmatpush.msra.mxu0 0.0
  %39 = vmatpush.msra.mxu0 0.0
  %40 = vmatpush.msra.mxu0 0.0
  %41 = vmatpush.msra.mxu0 0.0
  %42 = vmatpush.msra.mxu0 0.0
  %43 = vmatpush.msra.mxu0 0.0
  %44 = vmatpush.msra.mxu0 0.0
  %45 = vmatpush.msra.mxu0 0.0
  %46 = vmatpush.msra.mxu0 %v28
  %47 = vmatpush.msra.mxu0 %v27
  %48 = vmatpush.msra.mxu0 %v26
  %49 = vmatpush.msra.mxu0 %v25
  %50 = vmatpush.msra.mxu0 %v24
  %51 = vmatpush.msra.mxu0 %v23
  %52 = vmatpush.msra.mxu0 %v22
  %53 = vmatpush.msra.mxu0 %v21
  %54 = vmatmul.f32.gmra.mxu0 %v33
  %v55 = vpop.f32.mrf.mxu0
  %v56 = vadd.f32 %v30, %v55
  %57 = vmatmul.f32.gmra.mxu0 %v36
  %v58 = vpop.f32.mrf.mxu0
  %v59 = vadd.f32 %v30, %v58
  %60 = vdwg.mxu0
  %vm61 = vcmp.gt.f32.partialorder %v56, 0.0
  %vm62 = vcmp.gt.f32.partialorder %v59, 0.0
  %v63 = vmul.f32 %v56, 1.442695
  %v64 = vpow.pop %v63
  %v65 = vmul.f32 %v59, 1.442695
  %v66 = vpow.pop %v65
  %v67 = vsub.f32 %v64, 1.0
  %v68 = vsub.f32 %v66, 1.0
  %v69 = vmul.f32 %v67, 1.6732632
  %v70 = vmul.f32 %v68, 1.6732632
  %v71 = vsel %vm61, %v56, %v69
  %v72 = vsel %vm62, %v59, %v70
  %v73 = vmul.f32 %v71, 1.050701
  %v74 = vmul.f32 %v72, 1.050701
  %v75 = vld [vmem:[%s2 + $0x40] sm:$0xff]
  %v76 = vld [vmem:[%s2 + $0x48] sm:$0xff]
  %v77 = vld [vmem:[%s2 + $0x50] sm:$0xff]
  %v78 = vld [vmem:[%s2 + $0x58] sm:$0xff]
  %v79 = vld [vmem:[%s3 + $0x1] sm:$0x1]
  %v80 = vperm.slane %v79, 0
  %vm81 = vcmask 261120
  %v83 = vsel %vm81, %v73, 0
  %v86 = vsel %vm81, %v74, 0
  %88 = vmatpush.msra.mxu0 0.0
  %89 = vmatpush.msra.mxu0 0.0
  %90 = vmatpush.msra.mxu0 0.0
  %91 = vmatpush.msra.mxu0 0.0
  %92 = vmatpush.msra.mxu0 0.0
  %93 = vmatpush.msra.mxu0 0.0
  %94 = vmatpush.msra.mxu0 0.0
  %95 = vmatpush.msra.mxu0 0.0
  %96 = vmatpush.msra.mxu0 0.0
  %97 = vmatpush.msra.mxu0 0.0
  %98 = vmatpush.msra.mxu0 0.0
  %99 = vmatpush.msra.mxu0 0.0
  %100 = vmatpush.msra.mxu0 %v78
  %101 = vmatpush.msra.mxu0 %v77
  %102 = vmatpush.msra.mxu0 %v76
  %103 = vmatpush.msra.mxu0 %v75
  %104 = vmatmul.f32.gmra.mxu0 %v83
  %v105 = vpop.f32.mrf.mxu0
  %v106 = vadd.f32 %v80, %v105
  %107 = vmatmul.f32.gmra.mxu0 %v86
  %v108 = vpop.f32.mrf.mxu0
  %v109 = vadd.f32 %v80, %v108
  %110 = vdwg.mxu0
  %vm111 = vcmp.gt.f32.partialorder %v106, 0.0
  %vm112 = vcmp.gt.f32.partialorder %v109, 0.0
  %v113 = vmul.f32 %v106, 1.442695
  %v114 = vpow.pop %v113
  %v115 = vmul.f32 %v109, 1.442695
  %v116 = vpow.pop %v115
  %v117 = vsub.f32 %v114, 1.0
  %v118 = vsub.f32 %v116, 1.0
  %v119 = vmul.f32 %v117, 1.6732632
  %v120 = vmul.f32 %v118, 1.6732632
  %v121 = vsel %vm111, %v106, %v119
  %v122 = vsel %vm112, %v109, %v120
  %v123 = vmul.f32 %v121, 1.050701
  %v124 = vmul.f32 %v122, 1.050701
  %v125 = vld [vmem:[%s2 + $0x60] sm:$0xff]
  %v126 = vld [vmem:[%s2 + $0x68] sm:$0xff]
  %v127 = vld [vmem:[%s2 + $0x70] sm:$0xff]
  %v128 = vld [vmem:[%s2 + $0x78] sm:$0xff]
  %v129 = vld [vmem:[%s3 + $0x2] sm:$0x1]
  %v130 = vperm.slane %v129, 0
  %v132 = vsel %vm81, %v123, 0
  %v135 = vsel %vm81, %v124, 0
  %137 = vmatpush.msra.mxu0 0.0
  %138 = vmatpush.msra.mxu0 0.0
  %139 = vmatpush.msra.mxu0 0.0
  %140 = vmatpush.msra.mxu0 0.0
  %141 = vmatpush.msra.mxu0 0.0
  %142 = vmatpush.msra.mxu0 0.0
  %143 = vmatpush.msra.mxu0 0.0
  %144 = vmatpush.msra.mxu0 0.0
  %145 = vmatpush.msra.mxu0 0.0
  %146 = vmatpush.msra.mxu0 0.0
  %147 = vmatpush.msra.mxu0 0.0
  %148 = vmatpush.msra.mxu0 0.0
  %149 = vmatpush.msra.mxu0 %v128
  %150 = vmatpush.msra.mxu0 %v127
  %151 = vmatpush.msra.mxu0 %v126
  %152 = vmatpush.msra.mxu0 %v125
  %153 = vmatmul.f32.gmra.mxu0 %v132
  %v154 = vpop.f32.mrf.mxu0
  %v155 = vadd.f32 %v130, %v154
  %156 = vmatmul.f32.gmra.mxu0 %v135
  %v157 = vpop.f32.mrf.mxu0
  %v158 = vadd.f32 %v130, %v157
  %159 = vdwg.mxu0
  %v160 = vld [vmem:[%s2 + $0x80] sm:$0xff]
  %v161 = vld [vmem:[%s2 + $0x88] sm:$0xff]
  %vm162 = vcmask 130048
  %v164 = vsel %vm162, %v155, 0
  %v167 = vsel %vm162, %v158, 0
  %169 = vmatpush.msra.mxu0 0.0
  %170 = vmatpush.msra.mxu0 0.0
  %171 = vmatpush.msra.mxu0 0.0
  %172 = vmatpush.msra.mxu0 0.0
  %173 = vmatpush.msra.mxu0 0.0
  %174 = vmatpush.msra.mxu0 0.0
  %175 = vmatpush.msra.mxu0 0.0
  %176 = vmatpush.msra.mxu0 0.0
  %177 = vmatpush.msra.mxu0 0.0
  %178 = vmatpush.msra.mxu0 0.0
  %179 = vmatpush.msra.mxu0 0.0
  %180 = vmatpush.msra.mxu0 0.0
  %181 = vmatpush.msra.mxu0 0.0
  %182 = vmatpush.msra.mxu0 0.0
  %183 = vmatpush.msra.mxu0 %v161
  %184 = vmatpush.msra.mxu0 %v160
  %185 = vmatmul.f32.gmra.mxu0 %v164
  %v186 = vpop.f32.mrf.mxu0
  %v187 = vadd.f32 0.0, %v186
  %188 = vmatmul.f32.gmra.mxu0 %v167
  %v189 = vpop.f32.mrf.mxu0
  %v190 = vadd.f32 0.0, %v189
  %191 = vdwg.mxu0
  %v192 = vld [vmem:[%s3 + $0x3] sm:$0x1]
  %v193 = vperm.slane %v192, 0
  %v194 = vadd.f32 %v187, %v193
  %v195 = vadd.f32 %v190, %v193
  %vm196 = vcmp.gt.f32.partialorder %v194, 0.0
  %vm197 = vcmp.gt.f32.partialorder %v195, 0.0
  %v198 = vmul.f32 %v194, 1.442695
  %v199 = vpow.pop %v198
  %v200 = vmul.f32 %v195, 1.442695
  %v201 = vpow.pop %v200
  %v202 = vsub.f32 %v199, 1.0
  %v203 = vsub.f32 %v201, 1.0
  %v204 = vmul.f32 %v202, 1.6732632
  %v205 = vmul.f32 %v203, 1.6732632
  %v206 = vsel %vm196, %v194, %v204
  %v207 = vsel %vm197, %v195, %v205
  %v208 = vmul.f32 %v206, 1.050701
  %v209 = vmul.f32 %v207, 1.050701
  %v210 = vld [vmem:[%s2 + $0x90] sm:$0xff]
  %v211 = vld [vmem:[%s2 + $0x98] sm:$0xff]
  %v212 = vld [vmem:[%s2 + $0xa0] sm:$0xff]
  %v213 = vld [vmem:[%s2 + $0xa8] sm:$0xff]
  %v214 = vld [vmem:[%s3 + $0x4] sm:$0x1]
  %v215 = vperm.slane %v214, 0
  %v217 = vsel %vm81, %v208, 0
  %v220 = vsel %vm81, %v209, 0
  %222 = vmatpush.msra.mxu0 0.0
  %223 = vmatpush.msra.mxu0 0.0
  %224 = vmatpush.msra.mxu0 0.0
  %225 = vmatpush.msra.mxu0 0.0
  %226 = vmatpush.msra.mxu0 0.0
  %227 = vmatpush.msra.mxu0 0.0
  %228 = vmatpush.msra.mxu0 0.0
  %229 = vmatpush.msra.mxu0 0.0
  %230 = vmatpush.msra.mxu0 0.0
  %231 = vmatpush.msra.mxu0 0.0
  %232 = vmatpush.msra.mxu0 0.0
  %233 = vmatpush.msra.mxu0 0.0
  %234 = vmatpush.msra.mxu0 %v213
  %235 = vmatpush.msra.mxu0 %v212
  %236 = vmatpush.msra.mxu0 %v211
  %237 = vmatpush.msra.mxu0 %v210
  %238 = vmatmul.f32.gmra.mxu0 %v217
  %v239 = vpop.f32.mrf.mxu0
  %v240 = vadd.f32 %v215, %v239
  %241 = vmatmul.f32.gmra.mxu0 %v220
  %v242 = vpop.f32.mrf.mxu0
  %v243 = vadd.f32 %v215, %v242
  %244 = vdwg.mxu0
  %vm245 = vcmp.gt.f32.partialorder %v240, 0.0
  %vm246 = vcmp.gt.f32.partialorder %v243, 0.0
  %v247 = vmul.f32 %v240, 1.442695
  %v248 = vpow.pop %v247
  %v249 = vmul.f32 %v243, 1.442695
  %v250 = vpow.pop %v249
  %v251 = vsub.f32 %v248, 1.0
  %v252 = vsub.f32 %v250, 1.0
  %v253 = vmul.f32 %v251, 1.6732632
  %v254 = vmul.f32 %v252, 1.6732632
  %v255 = vsel %vm245, %v240, %v253
  %v256 = vsel %vm246, %v243, %v254
  %v257 = vmul.f32 %v255, 1.050701
  %v258 = vmul.f32 %v256, 1.050701
  %v259 = vld [vmem:[%s2 + $0xb0] sm:$0xff]
  %v260 = vld [vmem:[%s2 + $0xb8] sm:$0xff]
  %v261 = vld [vmem:[%s2 + $0xc0] sm:$0xff]
  %v262 = vld [vmem:[%s2 + $0xc8] sm:$0xff]
  %v263 = vld [vmem:[%s3 + $0x5] sm:$0x1]
  %v264 = vperm.slane %v263, 0
  %v266 = vsel %vm81, %v257, 0
  %v269 = vsel %vm81, %v258, 0
  %271 = vmatpush.msra.mxu0 0.0
  %272 = vmatpush.msra.mxu0 0.0
  %273 = vmatpush.msra.mxu0 0.0
  %274 = vmatpush.msra.mxu0 0.0
  %275 = vmatpush.msra.mxu0 0.0
  %276 = vmatpush.msra.mxu0 0.0
  %277 = vmatpush.msra.mxu0 0.0
  %278 = vmatpush.msra.mxu0 0.0
  %279 = vmatpush.msra.mxu0 0.0
  %280 = vmatpush.msra.mxu0 0.0
  %281 = vmatpush.msra.mxu0 0.0
  %282 = vmatpush.msra.mxu0 0.0
  %283 = vmatpush.msra.mxu0 %v262
  %284 = vmatpush.msra.mxu0 %v261
  %285 = vmatpush.msra.mxu0 %v260
  %286 = vmatpush.msra.mxu0 %v259
  %287 = vmatmul.f32.gmra.mxu0 %v266
  %v288 = vpop.f32.mrf.mxu0
  %v289 = vadd.f32 %v264, %v288
  %290 = vmatmul.f32.gmra.mxu0 %v269
  %v291 = vpop.f32.mrf.mxu0
  %v292 = vadd.f32 %v264, %v291
  %293 = vdwg.mxu0
  %vm294 = vcmp.gt.f32.partialorder %v289, 0.0
  %vm295 = vcmp.gt.f32.partialorder %v292, 0.0
  %v296 = vmul.f32 %v289, 1.442695
  %v297 = vpow.pop %v296
  %v298 = vmul.f32 %v292, 1.442695
  %v299 = vpow.pop %v298
  %v300 = vsub.f32 %v297, 1.0
  %v301 = vsub.f32 %v299, 1.0
  %v302 = vmul.f32 %v300, 1.6732632
  %v303 = vmul.f32 %v301, 1.6732632
  %v304 = vsel %vm294, %v289, %v302
  %v305 = vsel %vm295, %v292, %v303
  %v306 = vmul.f32 %v304, 1.050701
  %v307 = vmul.f32 %v305, 1.050701
  %v308 = vld [vmem:[%s2 + $0xd0] sm:$0xff]
  %v309 = vld [vmem:[%s2 + $0xd8] sm:$0xff]
  %v310 = vld [vmem:[%s2 + $0xe0] sm:$0xff]
  %v311 = vld [vmem:[%s2 + $0xe8] sm:$0xff]
  %v312 = vld [vmem:[%s3 + $0x6] sm:$0x1]
  %v313 = vperm.slane %v312, 0
  %v315 = vsel %vm81, %v306, 0
  %v318 = vsel %vm81, %v307, 0
  %320 = vmatpush.msra.mxu0 0.0
  %321 = vmatpush.msra.mxu0 0.0
  %322 = vmatpush.msra.mxu0 0.0
  %323 = vmatpush.msra.mxu0 0.0
  %324 = vmatpush.msra.mxu0 0.0
  %325 = vmatpush.msra.mxu0 0.0
  %326 = vmatpush.msra.mxu0 0.0
  %327 = vmatpush.msra.mxu0 0.0
  %328 = vmatpush.msra.mxu0 0.0
  %329 = vmatpush.msra.mxu0 0.0
  %330 = vmatpush.msra.mxu0 0.0
  %331 = vmatpush.msra.mxu0 0.0
  %332 = vmatpush.msra.mxu0 %v311
  %333 = vmatpush.msra.mxu0 %v310
  %334 = vmatpush.msra.mxu0 %v309
  %335 = vmatpush.msra.mxu0 %v308
  %336 = vmatmul.f32.gmra.mxu0 %v315
  %v337 = vpop.f32.mrf.mxu0
  %v338 = vadd.f32 %v313, %v337
  %339 = vmatmul.f32.gmra.mxu0 %v318
  %v340 = vpop.f32.mrf.mxu0
  %v341 = vadd.f32 %v313, %v340
  %342 = vdwg.mxu0
  %v343 = vld [vmem:[%s2 + $0xf0] sm:$0xff]
  %v344 = vld [vmem:[%s2 + $0xf8] sm:$0xff]
  %v346 = vsel %vm162, %v19, 0
  %v349 = vsel %vm162, %v20, 0
  %351 = vmatpush.msra.mxu0 0.0
  %352 = vmatpush.msra.mxu0 0.0
  %353 = vmatpush.msra.mxu0 0.0
  %354 = vmatpush.msra.mxu0 0.0
  %355 = vmatpush.msra.mxu0 0.0
  %356 = vmatpush.msra.mxu0 0.0
  %357 = vmatpush.msra.mxu0 0.0
  %358 = vmatpush.msra.mxu0 0.0
  %359 = vmatpush.msra.mxu0 0.0
  %360 = vmatpush.msra.mxu0 0.0
  %361 = vmatpush.msra.mxu0 0.0
  %362 = vmatpush.msra.mxu0 0.0
  %363 = vmatpush.msra.mxu0 0.0
  %364 = vmatpush.msra.mxu0 0.0
  %365 = vmatpush.msra.mxu0 %v344
  %366 = vmatpush.msra.mxu0 %v343
  %367 = vmatmul.f32.gmra.mxu0 %v346
  %v368 = vpop.f32.mrf.mxu0
  %v369 = vadd.f32 0.0, %v368
  %370 = vmatmul.f32.gmra.mxu0 %v349
  %v371 = vpop.f32.mrf.mxu0
  %v372 = vadd.f32 0.0, %v371
  %373 = vdwg.mxu0
  %376 = vrot.lane.b32.xlu0 %v369, 32
  %v377 = vpop.permute.xlu0 %376
  %378 = vrot.lane.b32.xlu0 %v372, 32
  %v379 = vpop.permute.xlu0 %378
  %v382 = vadd.f32 %v187, %v377
  %v383 = vadd.f32 %v190, %v379
  %v384 = vld [vmem:[%s3 + $0x7] sm:$0x1]
  %v385 = vperm.slane %v384, 0
  %387 = vrot.lane.b32.xlu0 %v385, 32
  %v388 = vpop.permute.xlu0 %387
  %v390 = vadd.f32 %v382, %v388
  %v391 = vadd.f32 %v383, %v388
  %v392 = vmax.f32 %v390, 0.0
  %v393 = vmax.f32 %v391, 0.0
  %v394 = vld [vmem:[%s2 + $0x100] sm:$0x1]
  %v395 = vperm.slane %v394, 0
  %397 = vrot.lane.b32.xlu0 %v395, 32
  %v398 = vpop.permute.xlu0 %397
  %v400 = vmul.f32 %v392, %v398
  %v401 = vmul.f32 %v393, %v398
  %404 = vrot.lane.b32.xlu0 %v400, 96
  %v405 = vpop.permute.xlu0 %404
  %406 = vrot.lane.b32.xlu0 %v401, 96
  %v407 = vpop.permute.xlu0 %406
  %v410 = vsel %vm81, %v405, 0.0
  %411 = vadd.xlane.f32.xlu0 %v410
  %v412 = vpop.xlane.xlu0 %411
  %v413 = vsel %vm81, %v407, 0.0
  %414 = vadd.xlane.f32.xlu0 %v413
  %v415 = vpop.xlane.xlu0 %414
  %v416 = vld [vmem:[%s3 + $0x8] sm:$0x1]
  %v417 = vperm.slane %v416, 0
  %v418 = vadd.f32 %v412, %v417
  %v419 = vadd.f32 %v415, %v417
  %420 = vrot.lane.b32.xlu0 %v155, 64
  %v421 = vpop.permute.xlu0 %420
  %422 = vrot.lane.b32.xlu0 %v158, 64
  %v423 = vpop.permute.xlu0 %422
  %428 = vrot.lane.b32.xlu0 %v418, 96
  %v429 = vpop.permute.xlu0 %428
  %430 = vrot.lane.b32.xlu0 %v419, 96
  %v431 = vpop.permute.xlu0 %430
  %v434 = vsel %vm31, %v338, %v421
  %v435 = vsel %vm31, %v341, %v423
  %vm436 = vcmask 785408
  %v437 = vsel %vm436, %v434, %v429
  %v438 = vsel %vm436, %v435, %v431
  %vm439 = vcmask 793600
  %v440 = vsel %vm439, %v437, 0.0
  %v441 = vsel %vm439, %v438, 0.0
  %442 = vst [vmem:[%s4] sm:$0xff] %v440
  %443 = vst [vmem:[%s4 + $0x8] sm:$0xff] %v441
  // Predicated region
  $region18: #{two_stage_vae_clf_forward.1} parent=0 // pred_check
    _
  $region19: #{two_stage_vae_clf_forward.1} parent=0 // pred_check_branch
    %445 = sbr.rel (0) target = $region21
  $region20: #{two_stage_vae_clf_forward.1} parent=0 // pred_region
    _
  $region21: #{two_stage_vae_clf_forward.1} parent=0 // pred_fallthru
    _
  // Predicated region
  $region22: #{two_stage_vae_clf_forward.1} parent=0 // pred_check
    _
  $region23: #{two_stage_vae_clf_forward.1} parent=0 // pred_check_branch
    %447 = sbr.rel (0) target = $region25
  $region24: #{two_stage_vae_clf_forward.1} parent=0 // pred_region
    _
  $region25: #{two_stage_vae_clf_forward.1} parent=0 // pred_fallthru
    _

</llo_original>
